<compile_context>
chip_gen: v7x
topology: tpu7x:2x2x1
jax: 0.10.0
libtpu: 0.0.40
codegen_flags: <defaults>
</compile_context>

<pallas_src>
import jax
import jax.numpy as jnp
from jax.experimental import pallas as pl
from jax.experimental.pallas import tpu as pltpu


LANE = 128        # TPU lane width (last-dim tiling unit)
SUBLANE = 8       # TPU sublane width (second-to-last-dim tiling unit)
TILE_M_MAX = 256  # batch tile; comfortably inside v7x's 32 MiB scoped VMEM


def _round_up(n, m):
    return ((n + m - 1) // m) * m


def mlp_kernel(x_ref, w1_ref, b1_ref, w2_ref, b2_ref, w3_ref, b3_ref, o_ref):
    """One (TILE_M, *) batch tile of the fused MLP.

    x / weights are bf16 (half the DMA bytes, 2x MXU rate); accumulation is
    f32 via preferred_element_type; biases stay f32 and are added to the f32
    accumulator before ReLU / the final store.
    """
    h = jnp.dot(x_ref[...], w1_ref[...], preferred_element_type=jnp.float32)
    h = jnp.maximum(h + b1_ref[...], 0.0).astype(w2_ref.dtype)

    h = jnp.dot(h, w2_ref[...], preferred_element_type=jnp.float32)
    h = jnp.maximum(h + b2_ref[...], 0.0).astype(w3_ref.dtype)

    out = jnp.dot(h, w3_ref[...], preferred_element_type=jnp.float32)
    o_ref[...] = (out + b3_ref[...]).astype(o_ref.dtype)


def network_forward(x, params):
    """Forward pass of Network (C1 -> ReLU -> C2 -> ReLU -> C3)."""
    w1, b1, w2, b2, w3, b3 = params
    batch, in_f = x.shape
    hid = w1.shape[1]
    out_f = w3.shape[1]

    # Lane-pad hidden/output dims to multiples of 128. Zero padding is exact:
    # padded hidden units get 0 pre-activation -> ReLU -> 0, and the padded
    # rows of the next weight are 0, so they contribute nothing.
    hid_p = _round_up(hid, LANE)
    out_p = _round_up(out_f, LANE)

    # Batch tile: multiple of 8 sublanes, capped at TILE_M_MAX.
    tile_m = min(TILE_M_MAX, _round_up(batch, SUBLANE))
    padded_batch = _round_up(batch, tile_m)
    num_tiles = padded_batch // tile_m

    bf16 = jnp.bfloat16
    x_p = jnp.pad(x, ((0, padded_batch - batch), (0, 0))).astype(bf16)
    w1_p = jnp.pad(w1, ((0, 0), (0, hid_p - hid))).astype(bf16)
    b1_p = jnp.pad(b1, ((0, 0), (0, hid_p - hid))).astype(jnp.float32)
    w2_p = jnp.pad(w2, ((0, hid_p - hid), (0, hid_p - hid))).astype(bf16)
    b2_p = jnp.pad(b2, ((0, 0), (0, hid_p - hid))).astype(jnp.float32)
    w3_p = jnp.pad(w3, ((0, hid_p - hid), (0, out_p - out_f))).astype(bf16)
    b3_p = jnp.pad(b3, ((0, 0), (0, out_p - out_f))).astype(jnp.float32)

    out_dtype = x.dtype
    itemsize_out = jnp.dtype(out_dtype).itemsize

    flops = 2 * padded_batch * (in_f * hid_p + hid_p * hid_p + hid_p * out_p)
    bytes_accessed = (
        x_p.size * 2 + w1_p.size * 2 + w2_p.size * 2 + w3_p.size * 2
        + b1_p.size * 4 + b2_p.size * 4 + b3_p.size * 4
        + padded_batch * out_p * itemsize_out
    )

    # x / out tiled over the batch grid axis; weights & biases use a constant
    # index_map so they are fetched once and stay VMEM-resident.
    const = lambda i: (0, 0)
    grid_spec = pltpu.PrefetchScalarGridSpec(
        num_scalar_prefetch=0,
        grid=(num_tiles,),
        in_specs=[
            pl.BlockSpec((tile_m, in_f), lambda i: (i, 0)),   # x tile
            pl.BlockSpec((in_f, hid_p), const),               # W1
            pl.BlockSpec((1, hid_p), const),                  # b1
            pl.BlockSpec((hid_p, hid_p), const),              # W2
            pl.BlockSpec((1, hid_p), const),                  # b2
            pl.BlockSpec((hid_p, out_p), const),              # W3
            pl.BlockSpec((1, out_p), const),                  # b3
        ],
        out_specs=pl.BlockSpec((tile_m, out_p), lambda i: (i, 0)),
    )

    out_padded = pl.pallas_call(
        mlp_kernel,
        out_shape=jax.ShapeDtypeStruct((padded_batch, out_p), out_dtype),
        grid_spec=grid_spec,
        compiler_params=pltpu.CompilerParams(
            # 2 TensorCores on v7x; harmless no-op on v5e/v6e.
            dimension_semantics=("parallel",),
        ),
        cost_estimate=pl.CostEstimate(
            flops=flops, transcendentals=0, bytes_accessed=bytes_accessed),
    )(x_p, w1_p, b1_p, w2_p, b2_p, w3_p, b3_p)

    return out_padded[:batch, :out_f]


def init_params(key, input_size, hidden_size, output_size, dtype=jnp.float32):
    """Deterministic parameter init matching nn.Linear shapes.

    PyTorch nn.Linear stores weight as (out, in); we store the transpose
    (in, out) so the kernel computes x @ W directly on the MXU. Biases are
    2-D (1, out) for TPU-friendly layout; broadcasting over the batch dim
    matches PyTorch semantics exactly.
    """
    k1, k2, k3, k4, k5, k6 = jax.random.split(key, 6)

    def uniform(k, shape, fan_in):
        bound = 1.0 / jnp.sqrt(jnp.asarray(fan_in, dtype))
        return jax.random.uniform(k, shape, dtype, -bound, bound)

    w1 = uniform(k1, (input_size, hidden_size), input_size)
    b1 = uniform(k2, (1, hidden_size), input_size)
    w2 = uniform(k3, (hidden_size, hidden_size), hidden_size)
    b2 = uniform(k4, (1, hidden_size), hidden_size)
    w3 = uniform(k5, (hidden_size, output_size), hidden_size)
    b3 = uniform(k6, (1, output_size), hidden_size)
    return (w1, b1, w2, b2, w3, b3)


def reference_forward_f32(x, params):
    """Pure-JAX f32 reference (mirrors the PyTorch module exactly)."""
    w1, b1, w2, b2, w3, b3 = params
    h = jnp.maximum(x @ w1 + b1, 0.0)
    h = jnp.maximum(h @ w2 + b2, 0.0)
    return h @ w3 + b3


def reference_forward_bf16(x, params):
    """Pure-JAX reference with the kernel's bf16-operand / f32-accum recipe."""
    w1, b1, w2, b2, w3, b3 = params
    bf16 = jnp.bfloat16
    xb, w1b, w2b, w3b = (a.astype(bf16) for a in (x, w1, w2, w3))
    h = jnp.dot(xb, w1b, preferred_element_type=jnp.float32) + b1
    h = jnp.maximum(h, 0.0).astype(bf16)
    h = jnp.dot(h, w2b, preferred_element_type=jnp.float32) + b2
    h = jnp.maximum(h, 0.0).astype(bf16)
    return jnp.dot(h, w3b, preferred_element_type=jnp.float32) + b3


if __name__ == "__main__":
    input_size, hidden_size, output_size = 16, 32, 8

    key = jax.random.PRNGKey(0)
    k_x, k_p, k_x2 = jax.random.split(key, 3)
    params = init_params(k_p, input_size, hidden_size, output_size)

    fwd = jax.jit(network_forward)

    # Small case (single tile).
    batch = 8
    x = jax.random.normal(k_x, (batch, input_size), dtype=jnp.float32)
    out = jax.block_until_ready(fwd(x, params))
    assert out.shape == (batch, output_size)
    ref_bf16 = reference_forward_bf16(x, params)
    ref_f32 = reference_forward_f32(x, params)
    assert jnp.allclose(out, ref_bf16, atol=2e-3, rtol=2e-3), "mismatch vs bf16 ref"
    assert jnp.allclose(out, ref_f32, atol=5e-2, rtol=5e-2), "mismatch vs f32 ref"

    # Larger case exercising multi-tile grid + batch padding.
    batch2 = 300
    x2 = jax.random.normal(k_x2, (batch2, input_size), dtype=jnp.float32)
    out2 = jax.block_until_ready(fwd(x2, params))
    assert out2.shape == (batch2, output_size)
    ref2 = reference_forward_bf16(x2, params)
    assert jnp.allclose(out2, ref2, atol=2e-3, rtol=2e-3), "mismatch vs bf16 ref (tiled)"

    print("KERNEL_OK")
</pallas_src>

<mosaic_0001>
module attributes {stable_mosaic.version = 11 : i64} {
  func.func @mlp_kernel(%arg0: i32, %arg1: memref<8x16xbf16, #tpu.memory_space<vmem>>, %arg2: memref<16x128xbf16, #tpu.memory_space<vmem>>, %arg3: memref<1x128xf32, #tpu.memory_space<vmem>>, %arg4: memref<128x128xbf16, #tpu.memory_space<vmem>>, %arg5: memref<1x128xf32, #tpu.memory_space<vmem>>, %arg6: memref<128x128xbf16, #tpu.memory_space<vmem>>, %arg7: memref<1x128xf32, #tpu.memory_space<vmem>>, %arg8: memref<8x128xf32, #tpu.memory_space<vmem>>) attributes {dimension_semantics = [#tpu.dimension_semantics<parallel>], iteration_bounds = array<i64: 1>, scalar_prefetch = 0 : i64, scratch_operands = 0 : i64, tpu.core_type = #tpu.core_type<tc>, window_params = [{transform_indices = @transform_0, window_bounds = array<i64: 8, 16>}, {pipeline_mode = #tpu.pipeline_mode<synchronous>, transform_indices = @transform_1, window_bounds = array<i64: 16, 128>}, {pipeline_mode = #tpu.pipeline_mode<synchronous>, transform_indices = @transform_2, window_bounds = array<i64: 1, 128>}, {pipeline_mode = #tpu.pipeline_mode<synchronous>, transform_indices = @transform_3, window_bounds = array<i64: 128, 128>}, {pipeline_mode = #tpu.pipeline_mode<synchronous>, transform_indices = @transform_4, window_bounds = array<i64: 1, 128>}, {pipeline_mode = #tpu.pipeline_mode<synchronous>, transform_indices = @transform_5, window_bounds = array<i64: 128, 128>}, {pipeline_mode = #tpu.pipeline_mode<synchronous>, transform_indices = @transform_6, window_bounds = array<i64: 1, 128>}, {transform_indices = @transform_7, window_bounds = array<i64: 8, 128>}]} {
    %c0 = arith.constant 0 : index
    %c0_0 = arith.constant 0 : index
    %0 = vector.load %arg1[%c0, %c0_0] : memref<8x16xbf16, #tpu.memory_space<vmem>>, vector<8x16xbf16>
    %c0_1 = arith.constant 0 : index
    %c0_2 = arith.constant 0 : index
    %1 = vector.load %arg2[%c0_1, %c0_2] : memref<16x128xbf16, #tpu.memory_space<vmem>>, vector<16x128xbf16>
    %cst = arith.constant dense<0.000000e+00> : vector<8x128xf32>
    %2 = tpu.matmul %0, %1, %cst {dimension_numbers = #tpu.dot_dimension_numbers<[1], [0], [0], [1], [0, 0, 1, 1], [], []>} : vector<8x16xbf16>, vector<16x128xbf16>, vector<8x128xf32> -> vector<8x128xf32>
    %c0_3 = arith.constant 0 : index
    %c0_4 = arith.constant 0 : index
    %3 = vector.load %arg3[%c0_3, %c0_4] : memref<1x128xf32, #tpu.memory_space<vmem>>, vector<1x128xf32>
    %4 = vector.broadcast %3 : vector<1x128xf32> to vector<8x128xf32>
    %5 = arith.addf %2, %4 : vector<8x128xf32>
    %cst_5 = arith.constant 0.000000e+00 : f32
    %6 = vector.broadcast %cst_5 : f32 to vector<8x128xf32>
    %7 = arith.maximumf %5, %6 : vector<8x128xf32>
    %8 = arith.truncf %7 : vector<8x128xf32> to vector<8x128xbf16>
    %c0_6 = arith.constant 0 : index
    %c0_7 = arith.constant 0 : index
    %9 = vector.load %arg4[%c0_6, %c0_7] : memref<128x128xbf16, #tpu.memory_space<vmem>>, vector<128x128xbf16>
    %cst_8 = arith.constant dense<0.000000e+00> : vector<8x128xf32>
    %10 = tpu.matmul %8, %9, %cst_8 {dimension_numbers = #tpu.dot_dimension_numbers<[1], [0], [0], [1], [0, 0, 1, 1], [], []>} : vector<8x128xbf16>, vector<128x128xbf16>, vector<8x128xf32> -> vector<8x128xf32>
    %c0_9 = arith.constant 0 : index
    %c0_10 = arith.constant 0 : index
    %11 = vector.load %arg5[%c0_9, %c0_10] : memref<1x128xf32, #tpu.memory_space<vmem>>, vector<1x128xf32>
    %12 = vector.broadcast %11 : vector<1x128xf32> to vector<8x128xf32>
    %13 = arith.addf %10, %12 : vector<8x128xf32>
    %cst_11 = arith.constant 0.000000e+00 : f32
    %14 = vector.broadcast %cst_11 : f32 to vector<8x128xf32>
    %15 = arith.maximumf %13, %14 : vector<8x128xf32>
    %16 = arith.truncf %15 : vector<8x128xf32> to vector<8x128xbf16>
    %c0_12 = arith.constant 0 : index
    %c0_13 = arith.constant 0 : index
    %17 = vector.load %arg6[%c0_12, %c0_13] : memref<128x128xbf16, #tpu.memory_space<vmem>>, vector<128x128xbf16>
    %cst_14 = arith.constant dense<0.000000e+00> : vector<8x128xf32>
    %18 = tpu.matmul %16, %17, %cst_14 {dimension_numbers = #tpu.dot_dimension_numbers<[1], [0], [0], [1], [0, 0, 1, 1], [], []>} : vector<8x128xbf16>, vector<128x128xbf16>, vector<8x128xf32> -> vector<8x128xf32>
    %c0_15 = arith.constant 0 : index
    %c0_16 = arith.constant 0 : index
    %19 = vector.load %arg7[%c0_15, %c0_16] : memref<1x128xf32, #tpu.memory_space<vmem>>, vector<1x128xf32>
    %20 = vector.broadcast %19 : vector<1x128xf32> to vector<8x128xf32>
    %21 = arith.addf %18, %20 : vector<8x128xf32>
    %c0_17 = arith.constant 0 : index
    %c0_18 = arith.constant 0 : index
    %22 = vector.load %arg8[%c0_17, %c0_18] : memref<8x128xf32, #tpu.memory_space<vmem>>, vector<8x128xf32>
    tpu.vector_store %arg8[%c0_17, %c0_18], %21 {strides = array<i32>} : memref<8x128xf32, #tpu.memory_space<vmem>>, vector<8x128xf32>,
    return
  }
  func.func @transform_0(%arg0: i32) -> (i32, i32) {
    %c0_i32 = arith.constant 0 : i32
    %c0_i32_0 = arith.constant 0 : i32
    return %arg0, %c0_i32 : i32, i32
  }
  func.func @transform_1(%arg0: i32) -> (i32, i32) {
    %c0_i32 = arith.constant 0 : i32
    %c0_i32_0 = arith.constant 0 : i32
    %c0_i32_1 = arith.constant 0 : i32
    return %c0_i32, %c0_i32_0 : i32, i32
  }
  func.func @transform_2(%arg0: i32) -> (i32, i32) {
    %c0_i32 = arith.constant 0 : i32
    %c0_i32_0 = arith.constant 0 : i32
    %c0_i32_1 = arith.constant 0 : i32
    return %c0_i32, %c0_i32_0 : i32, i32
  }
  func.func @transform_3(%arg0: i32) -> (i32, i32) {
    %c0_i32 = arith.constant 0 : i32
    %c0_i32_0 = arith.constant 0 : i32
    %c0_i32_1 = arith.constant 0 : i32
    return %c0_i32, %c0_i32_0 : i32, i32
  }
  func.func @transform_4(%arg0: i32) -> (i32, i32) {
    %c0_i32 = arith.constant 0 : i32
    %c0_i32_0 = arith.constant 0 : i32
    %c0_i32_1 = arith.constant 0 : i32
    return %c0_i32, %c0_i32_0 : i32, i32
  }
  func.func @transform_5(%arg0: i32) -> (i32, i32) {
    %c0_i32 = arith.constant 0 : i32
    %c0_i32_0 = arith.constant 0 : i32
    %c0_i32_1 = arith.constant 0 : i32
    return %c0_i32, %c0_i32_0 : i32, i32
  }
  func.func @transform_6(%arg0: i32) -> (i32, i32) {
    %c0_i32 = arith.constant 0 : i32
    %c0_i32_0 = arith.constant 0 : i32
    %c0_i32_1 = arith.constant 0 : i32
    return %c0_i32, %c0_i32_0 : i32, i32
  }
  func.func @transform_7(%arg0: i32) -> (i32, i32) {
    %c0_i32 = arith.constant 0 : i32
    %c0_i32_0 = arith.constant 0 : i32
    return %arg0, %c0_i32 : i32, i32
  }
}

</mosaic_0001>

<llo_original>
// kernel: network_forward.1
$region0: #{network_forward.1}
  #allocation0 [shape = 'u32[]', space=smem, size = 0x4, offset = 0x4, fixed_abs, tag = 'smem constant byte address 0x4 - core index']
  #allocation1 [shape = 'u32[144,128]{1,0:T(1,128)}', space=vmem, size = 0x12000, scoped, tag = 'internal scratch']
  %s0 = inlined_call_operand.vmem [shape: bf16[8,16], index: 0, kind: input, shape index: {}]
  %s1 = inlined_call_operand.vmem [shape: bf16[16,128], index: 1, kind: input, shape index: {}]
  %s2 = inlined_call_operand.vmem [shape: f32[1,128], index: 2, kind: input, shape index: {}]
  %s3 = inlined_call_operand.vmem [shape: bf16[128,128], index: 3, kind: input, shape index: {}]
  %s4 = inlined_call_operand.vmem [shape: f32[1,128], index: 4, kind: input, shape index: {}]
  %s5 = inlined_call_operand.vmem [shape: bf16[128,128], index: 5, kind: input, shape index: {}]
  %s6 = inlined_call_operand.vmem [shape: f32[1,128], index: 6, kind: input, shape index: {}]
  %s7 = inlined_call_operand.hbm [shape: f32[8,128], index: 7, kind: output, shape index: {}]
  %s8 = sld [smem:[#allocation0]]
  $region38: #{network_forward.1} parent=0
    _
  %s10 = ssub.s32 1, %s8
  %s11 = scalar_select 0, %s10, %s8
  $region1: #{network_forward.1} parent=0
    #allocation2 [shape = 'u8[4096]{0}', space=vmem, size = 0x1000, scoped, tag = 'output window, operand 0, single buffered']
    #allocation3 [shape = 's32[1]{0}', space=sflag, size = 0x4, scoped, tag = 'scoped memory for network_forward.1']
    %12 = vsyncpa [#allocation3], 0
    // Predicated region
    $region2: #{network_forward.1} parent=1 // pred_check
      _
    $region3: #{network_forward.1} parent=1 // pred_check_branch
      %14 = sbr.rel (0) target = $region5
    $region4: #{network_forward.1} parent=1 // pred_region
      _
    $region5: #{network_forward.1} parent=1 // pred_fallthru
      _
    // Predicated region
    $region6: #{network_forward.1} parent=1 // pred_check
      _
    $region7: #{network_forward.1} parent=1 // pred_check_branch
      %16 = sbr.rel (0) target = $region9
    $region8: #{network_forward.1} parent=1 // pred_region
      _
    $region9: #{network_forward.1} parent=1 // pred_fallthru
      _
    // Predicated region
    $region10: #{network_forward.1} parent=1 // pred_check
      _
    $region11: #{network_forward.1} parent=1 // pred_check_branch
      %18 = sbr.rel (0) target = $region13
    $region12: #{network_forward.1} parent=1 // pred_region
      _
    $region13: #{network_forward.1} parent=1 // pred_fallthru
      _
    // Predicated region
    $region14: #{network_forward.1} parent=1 // pred_check
      _
    $region15: #{network_forward.1} parent=1 // pred_check_branch
      %20 = sbr.rel (0) target = $region17
    $region16: #{network_forward.1} parent=1 // pred_region
      _
    $region17: #{network_forward.1} parent=1 // pred_fallthru
      _
    // Predicated region
    $region18: #{network_forward.1} parent=1 // pred_check
      _
    $region19: #{network_forward.1} parent=1 // pred_check_branch
      %22 = sbr.rel (0) target = $region21
    $region20: #{network_forward.1} parent=1 // pred_region
      _
    $region21: #{network_forward.1} parent=1 // pred_fallthru
      _
    // Predicated region
    $region22: #{network_forward.1} parent=1 // pred_check
      _
    $region23: #{network_forward.1} parent=1 // pred_check_branch
      %24 = sbr.rel (0) target = $region25
    $region24: #{network_forward.1} parent=1 // pred_region
      _
    $region25: #{network_forward.1} parent=1 // pred_fallthru
      _
    // Predicated region
    $region26: #{network_forward.1} parent=1 // pred_check
      _
    $region27: #{network_forward.1} parent=1 // pred_check_branch
      %26 = sbr.rel (0) target = $region29
    $region28: #{network_forward.1} parent=1 // pred_region
      _
    $region29: #{network_forward.1} parent=1 // pred_fallthru
      _
    %v28 = vld [vmem:[%s0] sm:$0xf]
    %v29 = vld [vmem:[%s1] sm:$0xf]
    %v30 = vld [vmem:[%s1 + $0x4] sm:$0xf]
    %v31 = vld [vmem:[%s2] sm:$0x1]
    %v33 = vlaneseq
    %v34 = vshrl.u32 %v33, 7
    %v35 = vsub.s32 0, %v34
    %v36 = vrot.slane %v31, %v35
    %v40 = vunpack.c.l.b16 %v29
    %v41 = vunpack.c.l.b16 %v30
    %v42 = vpack.c.b16 %v41, %v40
    %vm44 = vcmask 130048
    %v46 = vsel %vm44, %v28, 0
    %48 = vmatprep.subr.bf16.mxu0 0
    %49 = vmatpush1.bf16.msra.mxu0 %v42
    %50 = vmatprep.subr.bf16.mxu0 0
    %51 = vmatpush1.bf16.msra.mxu0 0
    %52 = vmatprep.subr.bf16.mxu0 0
    %53 = vmatpush1.bf16.msra.mxu0 0
    %54 = vmatprep.subr.bf16.mxu0 0
    %55 = vmatpush1.bf16.msra.mxu0 0
    %56 = vmatprep.subr.bf16.mxu0 0
    %57 = vmatpush1.bf16.msra.mxu0 0
    %58 = vmatprep.subr.bf16.mxu0 0
    %59 = vmatpush1.bf16.msra.mxu0 0
    %60 = vmatprep.subr.bf16.mxu0 0
    %61 = vmatpush1.bf16.msra.mxu0 0
    %62 = vmatprep.subr.bf16.mxu0 0
    %63 = vmatpush1.bf16.msra.mxu0 0
    %64 = vmatprep.subr.bf16.mxu0 0
    %65 = vmatpush1.bf16.msra.mxu0 0
    %66 = vmatprep.subr.bf16.mxu0 0
    %67 = vmatpush1.bf16.msra.mxu0 0
    %68 = vmatprep.subr.bf16.mxu0 0
    %69 = vmatpush1.bf16.msra.mxu0 0
    %70 = vmatprep.subr.bf16.mxu0 0
    %71 = vmatpush1.bf16.msra.mxu0 0
    %72 = vmatprep.subr.bf16.mxu0 0
    %73 = vmatpush1.bf16.msra.mxu0 0
    %74 = vmatprep.subr.bf16.mxu0 0
    %75 = vmatpush1.bf16.msra.mxu0 0
    %76 = vmatprep.subr.bf16.mxu0 0
    %77 = vmatpush1.bf16.msra.mxu0 0
    %78 = vmatprep.subr.bf16.mxu0 0
    %79 = vmatpush1.bf16.msra.mxu0 0
    %80 = vmatprep.mubr.bf16.mxu0 0
    %81 = vmatmul.mubr.bf16.gmra.mrb[0].mxu0 %v46
    %v82 = vpop.f32.mrb[0].mxu0
    %v83 = vadd.f32 %v36, %v82
    %v84 = vpop.f32.mrb[0].mxu0
    %v85 = vpop.f32.mrb[0].mxu0
    %v86 = vpop.f32.mrb[0].mxu0
    %87 = vdwg.mxu0
    %v88 = vmax.f32 %v83, 0.0
    %v89 = vpack.c.bf16 %v88, %v88
    %v90 = vld [vmem:[%s3] sm:$0xf]
    %v91 = vld [vmem:[%s3 + $0x4] sm:$0xf]
    %v92 = vld [vmem:[%s3 + $0x8] sm:$0xf]
    %v93 = vld [vmem:[%s3 + $0xc] sm:$0xf]
    %v94 = vld [vmem:[%s3 + $0x10] sm:$0xf]
    %v95 = vld [vmem:[%s3 + $0x14] sm:$0xf]
    %v96 = vld [vmem:[%s3 + $0x18] sm:$0xf]
    %v97 = vld [vmem:[%s3 + $0x1c] sm:$0xf]
    %v98 = vld [vmem:[%s3 + $0x20] sm:$0xf]
    %v99 = vld [vmem:[%s3 + $0x24] sm:$0xf]
    %v100 = vld [vmem:[%s3 + $0x28] sm:$0xf]
    %v101 = vld [vmem:[%s3 + $0x2c] sm:$0xf]
    %v102 = vld [vmem:[%s3 + $0x30] sm:$0xf]
    %v103 = vld [vmem:[%s3 + $0x34] sm:$0xf]
    %v104 = vld [vmem:[%s3 + $0x38] sm:$0xf]
    %v105 = vld [vmem:[%s3 + $0x3c] sm:$0xf]
    %v106 = vld [vmem:[%s4] sm:$0x1]
    %v108 = vlaneseq
    %v109 = vshrl.u32 %v108, 7
    %v110 = vsub.s32 0, %v109
    %v111 = vrot.slane %v106, %v110
    %v129 = vunpack.c.l.b16 %v90
    %v130 = vunpack.c.l.b16 %v91
    %v131 = vunpack.c.l.b16 %v92
    %v132 = vunpack.c.l.b16 %v93
    %v133 = vunpack.c.l.b16 %v94
    %v134 = vunpack.c.l.b16 %v95
    %v135 = vunpack.c.l.b16 %v96
    %v136 = vunpack.c.l.b16 %v97
    %v137 = vunpack.c.l.b16 %v98
    %v138 = vunpack.c.l.b16 %v99
    %v139 = vunpack.c.l.b16 %v100
    %v140 = vunpack.c.l.b16 %v101
    %v141 = vunpack.c.l.b16 %v102
    %v142 = vunpack.c.l.b16 %v103
    %v143 = vunpack.c.l.b16 %v104
    %v144 = vunpack.c.l.b16 %v105
    %v145 = vpack.c.b16 %v130, %v129
    %v146 = vpack.c.b16 %v132, %v131
    %v147 = vpack.c.b16 %v134, %v133
    %v148 = vpack.c.b16 %v136, %v135
    %v149 = vpack.c.b16 %v138, %v137
    %v150 = vpack.c.b16 %v140, %v139
    %v151 = vpack.c.b16 %v142, %v141
    %v152 = vpack.c.b16 %v144, %v143
    %161 = vmatprep.subr.bf16.mxu0 0
    %162 = vmatpush1.bf16.msra.mxu0 %v145
    %163 = vmatprep.subr.bf16.mxu0 0
    %164 = vmatpush1.bf16.msra.mxu0 %v146
    %165 = vmatprep.subr.bf16.mxu0 0
    %166 = vmatpush1.bf16.msra.mxu0 %v147
    %167 = vmatprep.subr.bf16.mxu0 0
    %168 = vmatpush1.bf16.msra.mxu0 %v148
    %169 = vmatprep.subr.bf16.mxu0 0
    %170 = vmatpush1.bf16.msra.mxu0 %v149
    %171 = vmatprep.subr.bf16.mxu0 0
    %172 = vmatpush1.bf16.msra.mxu0 %v150
    %173 = vmatprep.subr.bf16.mxu0 0
    %174 = vmatpush1.bf16.msra.mxu0 %v151
    %175 = vmatprep.subr.bf16.mxu0 0
    %176 = vmatpush1.bf16.msra.mxu0 %v152
    %177 = vmatprep.subr.bf16.mxu0 0
    %178 = vmatpush1.bf16.msra.mxu0 0
    %179 = vmatprep.subr.bf16.mxu0 0
    %180 = vmatpush1.bf16.msra.mxu0 0
    %181 = vmatprep.subr.bf16.mxu0 0
    %182 = vmatpush1.bf16.msra.mxu0 0
    %183 = vmatprep.subr.bf16.mxu0 0
    %184 = vmatpush1.bf16.msra.mxu0 0
    %185 = vmatprep.subr.bf16.mxu0 0
    %186 = vmatpush1.bf16.msra.mxu0 0
    %187 = vmatprep.subr.bf16.mxu0 0
    %188 = vmatpush1.bf16.msra.mxu0 0
    %189 = vmatprep.subr.bf16.mxu0 0
    %190 = vmatpush1.bf16.msra.mxu0 0
    %191 = vmatprep.subr.bf16.mxu0 0
    %192 = vmatpush1.bf16.msra.mxu0 0
    %193 = vmatprep.mubr.bf16.mxu0 0
    %194 = vmatmul.mubr.bf16.gmra.mrb[0].mxu0 %v89
    %v195 = vpop.f32.mrb[0].mxu0
    %v196 = vadd.f32 %v111, %v195
    %v197 = vpop.f32.mrb[0].mxu0
    %v198 = vpop.f32.mrb[0].mxu0
    %v199 = vpop.f32.mrb[0].mxu0
    %200 = vdwg.mxu0
    %v201 = vmax.f32 %v196, 0.0
    %v202 = vpack.c.bf16 %v201, %v201
    %v203 = vld [vmem:[%s5] sm:$0xf]
    %v204 = vld [vmem:[%s5 + $0x4] sm:$0xf]
    %v205 = vld [vmem:[%s5 + $0x8] sm:$0xf]
    %v206 = vld [vmem:[%s5 + $0xc] sm:$0xf]
    %v207 = vld [vmem:[%s5 + $0x10] sm:$0xf]
    %v208 = vld [vmem:[%s5 + $0x14] sm:$0xf]
    %v209 = vld [vmem:[%s5 + $0x18] sm:$0xf]
    %v210 = vld [vmem:[%s5 + $0x1c] sm:$0xf]
    %v211 = vld [vmem:[%s5 + $0x20] sm:$0xf]
    %v212 = vld [vmem:[%s5 + $0x24] sm:$0xf]
    %v213 = vld [vmem:[%s5 + $0x28] sm:$0xf]
    %v214 = vld [vmem:[%s5 + $0x2c] sm:$0xf]
    %v215 = vld [vmem:[%s5 + $0x30] sm:$0xf]
    %v216 = vld [vmem:[%s5 + $0x34] sm:$0xf]
    %v217 = vld [vmem:[%s5 + $0x38] sm:$0xf]
    %v218 = vld [vmem:[%s5 + $0x3c] sm:$0xf]
    %v219 = vld [vmem:[%s6] sm:$0x1]
    %v221 = vlaneseq
    %v222 = vshrl.u32 %v221, 7
    %v223 = vsub.s32 0, %v222
    %v224 = vrot.slane %v219, %v223
    %v242 = vunpack.c.l.b16 %v203
    %v243 = vunpack.c.l.b16 %v204
    %v244 = vunpack.c.l.b16 %v205
    %v245 = vunpack.c.l.b16 %v206
    %v246 = vunpack.c.l.b16 %v207
    %v247 = vunpack.c.l.b16 %v208
    %v248 = vunpack.c.l.b16 %v209
    %v249 = vunpack.c.l.b16 %v210
    %v250 = vunpack.c.l.b16 %v211
    %v251 = vunpack.c.l.b16 %v212
    %v252 = vunpack.c.l.b16 %v213
    %v253 = vunpack.c.l.b16 %v214
    %v254 = vunpack.c.l.b16 %v215
    %v255 = vunpack.c.l.b16 %v216
    %v256 = vunpack.c.l.b16 %v217
    %v257 = vunpack.c.l.b16 %v218
    %v258 = vpack.c.b16 %v243, %v242
    %v259 = vpack.c.b16 %v245, %v244
    %v260 = vpack.c.b16 %v247, %v246
    %v261 = vpack.c.b16 %v249, %v248
    %v262 = vpack.c.b16 %v251, %v250
    %v263 = vpack.c.b16 %v253, %v252
    %v264 = vpack.c.b16 %v255, %v254
    %v265 = vpack.c.b16 %v257, %v256
    %274 = vmatprep.subr.bf16.mxu0 0
    %275 = vmatpush1.bf16.msra.mxu0 %v258
    %276 = vmatprep.subr.bf16.mxu0 0
    %277 = vmatpush1.bf16.msra.mxu0 %v259
    %278 = vmatprep.subr.bf16.mxu0 0
    %279 = vmatpush1.bf16.msra.mxu0 %v260
    %280 = vmatprep.subr.bf16.mxu0 0
    %281 = vmatpush1.bf16.msra.mxu0 %v261
    %282 = vmatprep.subr.bf16.mxu0 0
    %283 = vmatpush1.bf16.msra.mxu0 %v262
    %284 = vmatprep.subr.bf16.mxu0 0
    %285 = vmatpush1.bf16.msra.mxu0 %v263
    %286 = vmatprep.subr.bf16.mxu0 0
    %287 = vmatpush1.bf16.msra.mxu0 %v264
    %288 = vmatprep.subr.bf16.mxu0 0
    %289 = vmatpush1.bf16.msra.mxu0 %v265
    %290 = vmatprep.subr.bf16.mxu0 0
    %291 = vmatpush1.bf16.msra.mxu0 0
    %292 = vmatprep.subr.bf16.mxu0 0
    %293 = vmatpush1.bf16.msra.mxu0 0
    %294 = vmatprep.subr.bf16.mxu0 0
    %295 = vmatpush1.bf16.msra.mxu0 0
    %296 = vmatprep.subr.bf16.mxu0 0
    %297 = vmatpush1.bf16.msra.mxu0 0
    %298 = vmatprep.subr.bf16.mxu0 0
    %299 = vmatpush1.bf16.msra.mxu0 0
    %300 = vmatprep.subr.bf16.mxu0 0
    %301 = vmatpush1.bf16.msra.mxu0 0
    %302 = vmatprep.subr.bf16.mxu0 0
    %303 = vmatpush1.bf16.msra.mxu0 0
    %304 = vmatprep.subr.bf16.mxu0 0
    %305 = vmatpush1.bf16.msra.mxu0 0
    %306 = vmatprep.mubr.bf16.mxu0 0
    %307 = vmatmul.mubr.bf16.gmra.mrb[0].mxu0 %v202
    %v308 = vpop.f32.mrb[0].mxu0
    %v309 = vadd.f32 %v224, %v308
    %v310 = vpop.f32.mrb[0].mxu0
    %v311 = vpop.f32.mrb[0].mxu0
    %v312 = vpop.f32.mrb[0].mxu0
    %313 = vdwg.mxu0
    %314 = vst [vmem:[#allocation2] sm:$0xff] %v309
    // Predicated region
    $region30: #{network_forward.1} parent=1 // pred_check
      _
    $region31: #{network_forward.1} parent=1 // pred_check_branch
      %316 = sbr.rel (0) target = $region33
    $region32: #{network_forward.1} parent=1 // pred_region
      %s318 = ssub.s32 128, 128
      %319 = vsyncadd [#allocation3], %s318
      %s321 = sshll.u32 [#allocation2], 4
      %s322 = int_to_ptr.vmem [resolvable:$true] %s321
      %324 = dma.vmem_to_hbm [thread:$0]  %s322, 128, %s7, [#allocation3]
    $region33: #{network_forward.1} parent=1 // pred_fallthru
      _
    // Predicated region
    $region34: #{network_forward.1} parent=1 // pred_check
      _
    $region35: #{network_forward.1} parent=1 // pred_check_branch
      %326 = sbr.rel (0) target = $region37
    $region36: #{network_forward.1} parent=1 // pred_region
      %327 = dma.done [#allocation3], 128
    $region37: #{network_forward.1} parent=1 // pred_fallthru
      _
    %328 = vsyncpa [#allocation3], 1

</llo_original>
